<compile_context>
chip_gen: v7x
topology: tpu7x:2x2x1
jax: 0.10.0
libtpu: 0.0.40
codegen_flags: <defaults>
</compile_context>

<pallas_src>
import functools
import math

import jax
import jax.numpy as jnp
from jax.experimental import pallas as pl
from jax.experimental.pallas import tpu as pltpu


def _round_up(x: int, m: int) -> int:
    return ((x + m - 1) // m) * m


def _bilinear_resize_matrix(in_size: int, out_size: int) -> jnp.ndarray:
    """(out_size, in_size) bilinear interpolation matrix, half-pixel centers."""
    out_idx = jnp.arange(out_size, dtype=jnp.float32)
    src = (out_idx + 0.5) * (in_size / out_size) - 0.5
    lo = jnp.floor(src)
    frac = src - lo
    lo_i = jnp.clip(lo.astype(jnp.int32), 0, in_size - 1)
    hi_i = jnp.clip(lo.astype(jnp.int32) + 1, 0, in_size - 1)
    rows = jnp.arange(out_size)
    m = jnp.zeros((out_size, in_size), dtype=jnp.float32)
    m = m.at[rows, lo_i].add(1.0 - frac)
    m = m.at[rows, hi_i].add(frac)
    return m


def _vmem_budget_bytes() -> int:
    """Per-generation VMEM budget for block sizing (v7x has only 64 MiB)."""
    try:
        info = pltpu.get_tpu_info()
        cap = int(getattr(info, "vmem_capacity_bytes", 0))
        if cap > 0:
            return min(cap // 2, 64 * 1024 * 1024)
    except Exception:
        pass
    return 24 * 1024 * 1024  # conservative fallback: fits v7x 32 MiB scoped VMEM


def _pick_block_planes(num_planes: int, channels: int, in_row_bytes: int,
                       out_row_bytes: int, resident_bytes: int,
                       vmem_budget_bytes: int) -> int:
    """Planes per grid step.

    Constraints: multiple of the channel period C (so the in-kernel
    row->channel map is block-invariant) and, for multi-block grids, a multiple
    of the uint8 sublane tile (32).  Sized against the per-generation VMEM
    budget and capped so large inputs get >=2 (>=4) grid steps for v7x
    megacore sharding.
    """
    nc_c = _round_up(num_planes, channels)
    granule = (32 * channels) // math.gcd(32, channels)      # lcm(32, C)
    if nc_c <= 2 * granule:
        return nc_c                                           # single full block
    per_plane = 2 * in_row_bytes + 2 * out_row_bytes          # double-buffered
    usable = max(int(0.75 * vmem_budget_bytes) - resident_bytes,
                 per_plane * granule)
    cap = max((usable // per_plane) // granule * granule, granule)
    cap = min(cap, max((4096 // granule) * granule, granule))  # sane ceiling
    target_steps = 4 if nc_c >= 4 * granule else 2
    bp = min(cap, _round_up(-(-nc_c // target_steps), granule))
    return max(bp, granule)


def _preprocess_kernel(x_ref, k_hi_ref, k_lo_ref, sb_ref, o_ref, *, channels):
    # x_ref : (bp, Hi*Wi)        uint8 image planes
    # k_hi  : (Hi*Wi, HoWo_pad)  bf16 resize operator, high bf16 term
    # k_lo  : (Hi*Wi, HoWo_pad)  bf16 resize operator, low (residual) term
    # sb_ref: (C, 2) f32 in SMEM -> per-channel [scale=1/(255*std), bias=-mean/std]
    # o_ref : (bp, HoWo_pad) f32 (lane-dense minor dim, multiple of 128)
    x = x_ref[...].astype(jnp.bfloat16)                    # u8 -> bf16, exact
    y = jnp.dot(x, k_hi_ref[...], preferred_element_type=jnp.float32)
    y = y + jnp.dot(x, k_lo_ref[...], preferred_element_type=jnp.float32)

    # Rebuild per-plane (per-row) normalize constants from SMEM scalars.
    # bp % channels == 0, so row index mod C is the channel for every block.
    bp = o_ref.shape[0]
    row_c = jax.lax.broadcasted_iota(jnp.int32, (bp, 1), 0) % channels
    scale = jnp.zeros((bp, 1), jnp.float32)
    bias = jnp.zeros((bp, 1), jnp.float32)
    for cc in range(channels):
        sel = row_c == cc
        scale = jnp.where(sel, sb_ref[cc, 0], scale)
        bias = jnp.where(sel, sb_ref[cc, 1], bias)

    o_ref[...] = y * scale + bias


@functools.partial(jax.jit, static_argnames=("image_size",))
def data_preprocess(images_u8, mean, std, *, image_size: int):
    """images_u8: uint8 (N, C, H_in, W_in). Returns float32 (N, C, S, S)."""
    n, c, h_in, w_in = images_u8.shape
    h_out = w_out = image_size
    nc = n * c
    hiwi = h_in * w_in
    howo = h_out * w_out
    howo_pad = _round_up(howo, 128)                 # lane-dense output stores

    # Bilinear resize as one operator (row-major Kronecker identity):
    #   vec_row(Rh @ X @ Rw^T) = (Rh (x) Rw) vec_row(X)
    rh = _bilinear_resize_matrix(h_in, h_out)       # (H_out, H_in)
    rw = _bilinear_resize_matrix(w_in, w_out)       # (W_out, W_in)
    k = jnp.kron(rh, rw).T                          # (Hi*Wi, Ho*Wo) f32
    if howo_pad != howo:
        k = jnp.pad(k, ((0, 0), (0, howo_pad - howo)))
    # bf16 hi/lo split -> two native bf16 MXU passes ~ f32-accurate weights.
    k_hi = k.astype(jnp.bfloat16)
    k_lo = (k - k_hi.astype(jnp.float32)).astype(jnp.bfloat16)

    # ToTensor(/255) + Normalize folded into per-channel [scale, bias] (SMEM).
    std_f = std.astype(jnp.float32)
    mean_f = mean.astype(jnp.float32)
    sb = jnp.stack([1.0 / (255.0 * std_f), -(mean_f / std_f)], axis=1)  # (C, 2)

    # VMEM-aware plane blocking (double-buffered blocks + resident operator).
    in_row_bytes = _round_up(hiwi, 128)             # u8, lane-padded
    out_row_bytes = howo_pad * 4                    # f32
    resident_bytes = 2 * 2 * hiwi * howo_pad * 2    # k_hi + k_lo, 2 buffers, bf16
    budget = _vmem_budget_bytes()
    bp = _pick_block_planes(nc, c, in_row_bytes, out_row_bytes,
                            resident_bytes, budget)
    padded_nc = _round_up(nc, bp)

    # Wrapper-side layout plumbing (free, C-order): planes stacked, rows flat.
    x_flat = images_u8.reshape(nc, hiwi)
    if padded_nc != nc:
        x_flat = jnp.pad(x_flat, ((0, padded_nc - nc), (0, 0)))

    grid = (padded_nc // bp,)
    kernel = functools.partial(_preprocess_kernel, channels=c)

    out = pl.pallas_call(
        kernel,
        out_shape=jax.ShapeDtypeStruct((padded_nc, howo_pad), jnp.float32),
        grid_spec=pltpu.PrefetchScalarGridSpec(
            num_scalar_prefetch=0,
            grid=grid,
            in_specs=[
                # block of uint8 planes: one large contiguous DMA per step
                pl.BlockSpec((bp, hiwi), lambda i: (i, 0)),
                # resize operator (hi/lo): constant index map -> stays resident
                pl.BlockSpec((hiwi, howo_pad), lambda i: (0, 0)),
                pl.BlockSpec((hiwi, howo_pad), lambda i: (0, 0)),
                # tiny per-channel normalize table in SMEM (no VMEM lane padding)
                pl.BlockSpec(memory_space=pltpu.MemorySpace.SMEM),
            ],
            # lane-dense output block (minor dim is a multiple of 128)
            out_specs=pl.BlockSpec((bp, howo_pad), lambda i: (i, 0)),
        ),
        compiler_params=pltpu.CompilerParams(
            dimension_semantics=("parallel",),
            vmem_limit_bytes=max(budget, 32 * 1024 * 1024),
        ),
    )(x_flat, k_hi, k_lo, sb)

    out = out[:nc, :howo]
    return out.reshape(n, c, h_out, w_out)


def reference_preprocess(images_u8, mean, std, image_size):
    """Pure-JAX reference (separable bilinear resize + /255 + normalize)."""
    x = images_u8.astype(jnp.float32)
    n, c, h_in, w_in = x.shape
    rh = _bilinear_resize_matrix(h_in, image_size)
    rw = _bilinear_resize_matrix(w_in, image_size)
    hp = jax.lax.Precision.HIGHEST
    y = jnp.einsum("oh,nchw->ncow", rh, x, precision=hp)
    y = jnp.einsum("nchw,ow->ncho", y, rw, precision=hp)
    y = y / 255.0
    return (y - mean[None, :, None, None]) / std[None, :, None, None]


if __name__ == "__main__":
    key = jax.random.PRNGKey(0)
    k1, k2 = jax.random.split(key)

    # Case 1: exactly the module's transform config -- image_size=16,
    # Normalize(mean=[0,0,0], std=[1,1,1]); small "raw" 20x20 RGB batch of 2.
    image_size = 16
    N, C, H_in, W_in = 2, 3, 20, 20
    x_u8 = jax.random.randint(k1, (N, C, H_in, W_in), 0, 256,
                              dtype=jnp.int32).astype(jnp.uint8)
    mean = jnp.zeros((C,), dtype=jnp.float32)
    std = jnp.ones((C,), dtype=jnp.float32)

    out = jax.block_until_ready(
        data_preprocess(x_u8, mean, std, image_size=image_size))
    ref = reference_preprocess(x_u8, mean, std, image_size)
    assert out.shape == (N, C, image_size, image_size), out.shape
    err1 = float(jnp.max(jnp.abs(out - ref)))
    assert jnp.allclose(out, ref, atol=2e-4, rtol=2e-4), err1

    # Case 2: larger batch (multi-block grid + plane padding) with non-trivial
    # per-channel normalization to exercise the SMEM scale/bias path.
    N2 = 96
    x2 = jax.random.randint(k2, (N2, C, H_in, W_in), 0, 256,
                            dtype=jnp.int32).astype(jnp.uint8)
    mean2 = jnp.array([0.485, 0.456, 0.406], dtype=jnp.float32)
    std2 = jnp.array([0.229, 0.224, 0.225], dtype=jnp.float32)
    out2 = jax.block_until_ready(
        data_preprocess(x2, mean2, std2, image_size=image_size))
    ref2 = reference_preprocess(x2, mean2, std2, image_size)
    err2 = float(jnp.max(jnp.abs(out2 - ref2)))
    assert jnp.allclose(out2, ref2, atol=5e-4, rtol=5e-4), err2

    print("KERNEL_OK")
</pallas_src>

<mosaic_0001>
module attributes {stable_mosaic.version = 11 : i64} {
  func.func private @main(%arg0: i32) attributes {dimension_semantics = [#tpu.dimension_semantics<core_parallel>], iteration_bounds = array<i64: 2>, tpu.core_type = #tpu.core_type<sc_scalar_subcore>, window_params = []} {
    return
  }
}

module attributes {stable_mosaic.version = 11 : i64} {
  func.func private @main(%arg0: i32) attributes {dimension_semantics = [#tpu.dimension_semantics<core_parallel>], iteration_bounds = array<i64: 2>, tpu.core_type = #tpu.core_type<sc_scalar_subcore>, window_params = []} {
    return
  }
}

module attributes {stable_mosaic.version = 11 : i64} {
  func.func @_preprocess_kernel(%arg0: i32, %arg1: memref<6x400xi8, #tpu.memory_space<vmem>>, %arg2: memref<400x256xbf16, #tpu.memory_space<vmem>>, %arg3: memref<400x256xbf16, #tpu.memory_space<vmem>>, %arg4: memref<3x2xf32, #tpu.memory_space<smem>>, %arg5: memref<6x256xf32, #tpu.memory_space<vmem>>) attributes {dimension_semantics = [#tpu.dimension_semantics<parallel>], iteration_bounds = array<i64: 1>, scalar_prefetch = 0 : i64, scratch_operands = 0 : i64, tpu.core_type = #tpu.core_type<tc>, window_params = [{transform_indices = @transform_0, window_bounds = array<i64: 6, 400>}, {pipeline_mode = #tpu.pipeline_mode<synchronous>, transform_indices = @transform_1, window_bounds = array<i64: 400, 256>}, {pipeline_mode = #tpu.pipeline_mode<synchronous>, transform_indices = @transform_2, window_bounds = array<i64: 400, 256>}, {transform_indices = @transform_3, window_bounds = array<i64: 3, 2>}, {transform_indices = @transform_4, window_bounds = array<i64: 6, 256>}]} {
    %c0 = arith.constant 0 : index
    %c0_0 = arith.constant 0 : index
    %0 = vector.load %arg1[%c0, %c0_0] : memref<6x400xi8, #tpu.memory_space<vmem>>, vector<6x400xi8>
    %1 = arith.uitofp %0 : vector<6x400xi8> to vector<6x400xbf16>
    %c0_1 = arith.constant 0 : index
    %c0_2 = arith.constant 0 : index
    %2 = vector.load %arg2[%c0_1, %c0_2] : memref<400x256xbf16, #tpu.memory_space<vmem>>, vector<400x256xbf16>
    %cst = arith.constant dense<0.000000e+00> : vector<6x256xf32>
    %3 = tpu.matmul %1, %2, %cst {dimension_numbers = #tpu.dot_dimension_numbers<[1], [0], [0], [1], [0, 0, 1, 1], [], []>} : vector<6x400xbf16>, vector<400x256xbf16>, vector<6x256xf32> -> vector<6x256xf32>
    %c0_3 = arith.constant 0 : index
    %c0_4 = arith.constant 0 : index
    %4 = vector.load %arg3[%c0_3, %c0_4] : memref<400x256xbf16, #tpu.memory_space<vmem>>, vector<400x256xbf16>
    %cst_5 = arith.constant dense<0.000000e+00> : vector<6x256xf32>
    %5 = tpu.matmul %1, %4, %cst_5 {dimension_numbers = #tpu.dot_dimension_numbers<[1], [0], [0], [1], [0, 0, 1, 1], [], []>} : vector<6x400xbf16>, vector<400x256xbf16>, vector<6x256xf32> -> vector<6x256xf32>
    %6 = arith.addf %3, %5 : vector<6x256xf32>
    %7 = tpu.iota {dimensions = array<i32: 0>} : vector<6x1xi32>
    %c3_i32 = arith.constant 3 : i32
    %c0_i32 = arith.constant 0 : i32
    %8 = arith.cmpi eq, %c3_i32, %c0_i32 : i32
    %c1_i32 = arith.constant 1 : i32
    %9 = arith.select %8, %c1_i32, %c3_i32 : i32
    %10 = vector.broadcast %9 : i32 to vector<6x1xi32>
    %11 = arith.remsi %7, %10 : vector<6x1xi32>
    %c0_i32_6 = arith.constant 0 : i32
    %12 = vector.broadcast %c0_i32_6 : i32 to vector<6x1xi32>
    %13 = arith.cmpi ne, %11, %12 : vector<6x1xi32>
    %c0_i32_7 = arith.constant 0 : i32
    %14 = vector.broadcast %c0_i32_7 : i32 to vector<6x1xi32>
    %15 = arith.cmpi slt, %11, %14 : vector<6x1xi32>
    %c0_i32_8 = arith.constant 0 : i32
    %16 = arith.cmpi slt, %9, %c0_i32_8 : i32
    %17 = vector.broadcast %16 : i1 to vector<6x1xi1>
    %18 = vector.broadcast %17 : vector<6x1xi1> to vector<6x1xi1>
    %19 = arith.xori %15, %18 : vector<6x1xi1>
    %20 = arith.andi %19, %13 : vector<6x1xi1>
    %21 = vector.broadcast %9 : i32 to vector<6x1xi32>
    %22 = arith.addi %11, %21 : vector<6x1xi32>
    %23 = arith.select %20, %22, %11 : vector<6x1xi1>, vector<6x1xi32>
    %cst_9 = arith.constant 0.000000e+00 : f32
    %24 = vector.broadcast %cst_9 : f32 to vector<6x1xf32>
    %cst_10 = arith.constant 0.000000e+00 : f32
    %25 = vector.broadcast %cst_10 : f32 to vector<6x1xf32>
    %c0_i32_11 = arith.constant 0 : i32
    %26 = vector.broadcast %c0_i32_11 : i32 to vector<6x1xi32>
    %27 = arith.cmpi eq, %23, %26 : vector<6x1xi32>
    %c0_12 = arith.constant 0 : index
    %c0_13 = arith.constant 0 : index
    %28 = memref.load %arg4[%c0_12, %c0_13] : memref<3x2xf32, #tpu.memory_space<smem>>
    %29 = vector.broadcast %28 : f32 to vector<6x1xf32>
    %30 = arith.select %27, %29, %24 : vector<6x1xi1>, vector<6x1xf32>
    %c0_14 = arith.constant 0 : index
    %c1 = arith.constant 1 : index
    %31 = memref.load %arg4[%c0_14, %c1] : memref<3x2xf32, #tpu.memory_space<smem>>
    %32 = vector.broadcast %31 : f32 to vector<6x1xf32>
    %33 = arith.select %27, %32, %25 : vector<6x1xi1>, vector<6x1xf32>
    %c1_i32_15 = arith.constant 1 : i32
    %34 = vector.broadcast %c1_i32_15 : i32 to vector<6x1xi32>
    %35 = arith.cmpi eq, %23, %34 : vector<6x1xi32>
    %c1_16 = arith.constant 1 : index
    %c0_17 = arith.constant 0 : index
    %36 = memref.load %arg4[%c1_16, %c0_17] : memref<3x2xf32, #tpu.memory_space<smem>>
    %37 = vector.broadcast %36 : f32 to vector<6x1xf32>
    %38 = arith.select %35, %37, %30 : vector<6x1xi1>, vector<6x1xf32>
    %c1_18 = arith.constant 1 : index
    %c1_19 = arith.constant 1 : index
    %39 = memref.load %arg4[%c1_18, %c1_19] : memref<3x2xf32, #tpu.memory_space<smem>>
    %40 = vector.broadcast %39 : f32 to vector<6x1xf32>
    %41 = arith.select %35, %40, %33 : vector<6x1xi1>, vector<6x1xf32>
    %c2_i32 = arith.constant 2 : i32
    %42 = vector.broadcast %c2_i32 : i32 to vector<6x1xi32>
    %43 = arith.cmpi eq, %23, %42 : vector<6x1xi32>
    %c2 = arith.constant 2 : index
    %c0_20 = arith.constant 0 : index
    %44 = memref.load %arg4[%c2, %c0_20] : memref<3x2xf32, #tpu.memory_space<smem>>
    %45 = vector.broadcast %44 : f32 to vector<6x1xf32>
    %46 = arith.select %43, %45, %38 : vector<6x1xi1>, vector<6x1xf32>
    %c2_21 = arith.constant 2 : index
    %c1_22 = arith.constant 1 : index
    %47 = memref.load %arg4[%c2_21, %c1_22] : memref<3x2xf32, #tpu.memory_space<smem>>
    %48 = vector.broadcast %47 : f32 to vector<6x1xf32>
    %49 = arith.select %43, %48, %41 : vector<6x1xi1>, vector<6x1xf32>
    %50 = vector.broadcast %46 : vector<6x1xf32> to vector<6x256xf32>
    %51 = arith.mulf %6, %50 : vector<6x256xf32>
    %52 = vector.broadcast %49 : vector<6x1xf32> to vector<6x256xf32>
    %53 = arith.addf %51, %52 : vector<6x256xf32>
    %c0_23 = arith.constant 0 : index
    %c0_24 = arith.constant 0 : index
    %54 = vector.load %arg5[%c0_23, %c0_24] : memref<6x256xf32, #tpu.memory_space<vmem>>, vector<6x256xf32>
    tpu.vector_store %arg5[%c0_23, %c0_24], %53 {strides = array<i32>} : memref<6x256xf32, #tpu.memory_space<vmem>>, vector<6x256xf32>,
    return
  }
  func.func @transform_0(%arg0: i32) -> (i32, i32) {
    %c0_i32 = arith.constant 0 : i32
    %c0_i32_0 = arith.constant 0 : i32
    return %arg0, %c0_i32 : i32, i32
  }
  func.func @transform_1(%arg0: i32) -> (i32, i32) {
    %c0_i32 = arith.constant 0 : i32
    %c0_i32_0 = arith.constant 0 : i32
    %c0_i32_1 = arith.constant 0 : i32
    return %c0_i32, %c0_i32_0 : i32, i32
  }
  func.func @transform_2(%arg0: i32) -> (i32, i32) {
    %c0_i32 = arith.constant 0 : i32
    %c0_i32_0 = arith.constant 0 : i32
    %c0_i32_1 = arith.constant 0 : i32
    return %c0_i32, %c0_i32_0 : i32, i32
  }
  func.func @transform_3(%arg0: i32) -> (i32, i32) {
    %c0_i32 = arith.constant 0 : i32
    %c0_i32_0 = arith.constant 0 : i32
    %c0_i32_1 = arith.constant 0 : i32
    return %c0_i32, %c0_i32_0 : i32, i32
  }
  func.func @transform_4(%arg0: i32) -> (i32, i32) {
    %c0_i32 = arith.constant 0 : i32
    %c0_i32_0 = arith.constant 0 : i32
    return %arg0, %c0_i32 : i32, i32
  }
}

</mosaic_0001>

<llo_original>
// kernel: data_preprocess.1
$region0: #{data_preprocess.1}
  #allocation0 [shape = 'u32[]', space=smem, size = 0x4, offset = 0x4, fixed_abs, tag = 'smem constant byte address 0x4 - core index']
  #allocation1 [shape = 'u32[144,128]{1,0:T(1,128)}', space=vmem, size = 0x12000, scoped, tag = 'internal scratch']
  %s0 = inlined_call_operand.vmem [shape: u8[6,400], index: 0, kind: input, shape index: {}]
  %s1 = inlined_call_operand.vmem [shape: bf16[400,256], index: 1, kind: input, shape index: {}]
  %s2 = inlined_call_operand.vmem [shape: bf16[400,256], index: 2, kind: input, shape index: {}]
  %s3 = inlined_call_operand.vmem [shape: f32[3,2], index: 3, kind: input, shape index: {}]
  %s4 = inlined_call_operand.vmem [shape: f32[6,256], index: 4, kind: output, shape index: {}]
  %s5 = sld [smem:[#allocation0]]
  $region30: #{data_preprocess.1} parent=0
    _
  %s7 = ssub.s32 1, %s5
  %s8 = scalar_select 0, %s7, %s5
  $region1: #{data_preprocess.1} parent=0
    #allocation2 [shape = 'u8[2048]{0}', space=smem, size = 0x800, scoped, tag = 'input window, operand 3, single buffered']
    #allocation3 [shape = 's32[1]{0}', space=sflag, size = 0x4, scoped, tag = 'scoped memory for data_preprocess.1']
    %9 = vsyncpa [#allocation3], 0
    // Predicated region
    $region2: #{data_preprocess.1} parent=1 // pred_check
      _
    $region3: #{data_preprocess.1} parent=1 // pred_check_branch
      %11 = sbr.rel (0) target = $region5
    $region4: #{data_preprocess.1} parent=1 // pred_region
      _
    $region5: #{data_preprocess.1} parent=1 // pred_fallthru
      _
    // Predicated region
    $region6: #{data_preprocess.1} parent=1 // pred_check
      _
    $region7: #{data_preprocess.1} parent=1 // pred_check_branch
      %13 = sbr.rel (0) target = $region9
    $region8: #{data_preprocess.1} parent=1 // pred_region
      _
    $region9: #{data_preprocess.1} parent=1 // pred_fallthru
      _
    // Predicated region
    $region10: #{data_preprocess.1} parent=1 // pred_check
      _
    $region11: #{data_preprocess.1} parent=1 // pred_check_branch
      %15 = sbr.rel (0) target = $region13
    $region12: #{data_preprocess.1} parent=1 // pred_region
      _
    $region13: #{data_preprocess.1} parent=1 // pred_fallthru
      _
    // Predicated region
    $region14: #{data_preprocess.1} parent=1 // pred_check
      _
    $region15: #{data_preprocess.1} parent=1 // pred_check_branch
      %17 = sbr.rel (0) target = $region17
    $region16: #{data_preprocess.1} parent=1 // pred_region
      %s19 = ssub.s32 64, 64
      %20 = vsyncadd [#allocation3], %s19
      %s22 = sshll.u32 %s3, 4
      %s23 = int_to_ptr.vmem [resolvable:$true] %s22
      %25 = dma.vmem_to_smem %s23, 64, [#allocation2], [#allocation3]
    $region17: #{data_preprocess.1} parent=1 // pred_fallthru
      _
    // Predicated region
    $region18: #{data_preprocess.1} parent=1 // pred_check
      _
    $region19: #{data_preprocess.1} parent=1 // pred_check_branch
      %27 = sbr.rel (0) target = $region21
    $region20: #{data_preprocess.1} parent=1 // pred_region
      %28 = dma.done [#allocation3], 64
    $region21: #{data_preprocess.1} parent=1 // pred_fallthru
      _
    %29 = sfence
    %v31 = vld [vmem:[%s0] sm:$0xff]
    %v32 = vunpack.c.l.u8.bf16 %v31
    %v33 = vunpack.c.h.u8.bf16 %v31
    %v34 = vld [vmem:[%s1] sm:$0xff]
    %v35 = vld [vmem:[%s1 + $0x8] sm:$0xff]
    %v36 = vld [vmem:[%s1 + $0x10] sm:$0xff]
    %v37 = vld [vmem:[%s1 + $0x18] sm:$0xff]
    %v38 = vld [vmem:[%s1 + $0x20] sm:$0xff]
    %v39 = vld [vmem:[%s1 + $0x28] sm:$0xff]
    %v40 = vld [vmem:[%s1 + $0x30] sm:$0xff]
    %v41 = vld [vmem:[%s1 + $0x38] sm:$0xff]
    %v42 = vld [vmem:[%s1 + $0x40] sm:$0xff]
    %v43 = vld [vmem:[%s1 + $0x48] sm:$0xff]
    %v44 = vld [vmem:[%s1 + $0x50] sm:$0xff]
    %v45 = vld [vmem:[%s1 + $0x58] sm:$0xff]
    %v46 = vld [vmem:[%s1 + $0x60] sm:$0xff]
    %v47 = vld [vmem:[%s1 + $0x68] sm:$0xff]
    %v48 = vld [vmem:[%s1 + $0x70] sm:$0xff]
    %v49 = vld [vmem:[%s1 + $0x78] sm:$0xff]
    %v50 = vld [vmem:[%s1 + $0x80] sm:$0xff]
    %v51 = vld [vmem:[%s1 + $0x88] sm:$0xff]
    %v52 = vld [vmem:[%s1 + $0x90] sm:$0xff]
    %v53 = vld [vmem:[%s1 + $0x98] sm:$0xff]
    %v54 = vld [vmem:[%s1 + $0xa0] sm:$0xff]
    %v55 = vld [vmem:[%s1 + $0xa8] sm:$0xff]
    %v56 = vld [vmem:[%s1 + $0xb0] sm:$0xff]
    %v57 = vld [vmem:[%s1 + $0xb8] sm:$0xff]
    %v58 = vld [vmem:[%s1 + $0xc0] sm:$0xff]
    %v59 = vld [vmem:[%s1 + $0xc8] sm:$0xff]
    %v60 = vld [vmem:[%s1 + $0xd0] sm:$0xff]
    %v61 = vld [vmem:[%s1 + $0xd8] sm:$0xff]
    %v62 = vld [vmem:[%s1 + $0xe0] sm:$0xff]
    %v63 = vld [vmem:[%s1 + $0xe8] sm:$0xff]
    %v64 = vld [vmem:[%s1 + $0xf0] sm:$0xff]
    %v65 = vld [vmem:[%s1 + $0xf8] sm:$0xff]
    %v66 = vld [vmem:[%s1 + $0x100] sm:$0xff]
    %v67 = vld [vmem:[%s1 + $0x108] sm:$0xff]
    %v68 = vld [vmem:[%s1 + $0x110] sm:$0xff]
    %v69 = vld [vmem:[%s1 + $0x118] sm:$0xff]
    %v70 = vld [vmem:[%s1 + $0x120] sm:$0xff]
    %v71 = vld [vmem:[%s1 + $0x128] sm:$0xff]
    %v72 = vld [vmem:[%s1 + $0x130] sm:$0xff]
    %v73 = vld [vmem:[%s1 + $0x138] sm:$0xff]
    %v74 = vld [vmem:[%s1 + $0x140] sm:$0xff]
    %v75 = vld [vmem:[%s1 + $0x148] sm:$0xff]
    %v76 = vld [vmem:[%s1 + $0x150] sm:$0xff]
    %v77 = vld [vmem:[%s1 + $0x158] sm:$0xff]
    %v78 = vld [vmem:[%s1 + $0x160] sm:$0xff]
    %v79 = vld [vmem:[%s1 + $0x168] sm:$0xff]
    %v80 = vld [vmem:[%s1 + $0x170] sm:$0xff]
    %v81 = vld [vmem:[%s1 + $0x178] sm:$0xff]
    %v82 = vld [vmem:[%s1 + $0x180] sm:$0xff]
    %v83 = vld [vmem:[%s1 + $0x188] sm:$0xff]
    %v84 = vld [vmem:[%s2] sm:$0xff]
    %v85 = vld [vmem:[%s2 + $0x8] sm:$0xff]
    %v86 = vld [vmem:[%s2 + $0x10] sm:$0xff]
    %v87 = vld [vmem:[%s2 + $0x18] sm:$0xff]
    %v88 = vld [vmem:[%s2 + $0x20] sm:$0xff]
    %v89 = vld [vmem:[%s2 + $0x28] sm:$0xff]
    %v90 = vld [vmem:[%s2 + $0x30] sm:$0xff]
    %v91 = vld [vmem:[%s2 + $0x38] sm:$0xff]
    %v92 = vld [vmem:[%s2 + $0x40] sm:$0xff]
    %v93 = vld [vmem:[%s2 + $0x48] sm:$0xff]
    %v94 = vld [vmem:[%s2 + $0x50] sm:$0xff]
    %v95 = vld [vmem:[%s2 + $0x58] sm:$0xff]
    %v96 = vld [vmem:[%s2 + $0x60] sm:$0xff]
    %v97 = vld [vmem:[%s2 + $0x68] sm:$0xff]
    %v98 = vld [vmem:[%s2 + $0x70] sm:$0xff]
    %v99 = vld [vmem:[%s2 + $0x78] sm:$0xff]
    %v100 = vld [vmem:[%s2 + $0x80] sm:$0xff]
    %v101 = vld [vmem:[%s2 + $0x88] sm:$0xff]
    %v102 = vld [vmem:[%s2 + $0x90] sm:$0xff]
    %v103 = vld [vmem:[%s2 + $0x98] sm:$0xff]
    %v104 = vld [vmem:[%s2 + $0xa0] sm:$0xff]
    %v105 = vld [vmem:[%s2 + $0xa8] sm:$0xff]
    %v106 = vld [vmem:[%s2 + $0xb0] sm:$0xff]
    %v107 = vld [vmem:[%s2 + $0xb8] sm:$0xff]
    %v108 = vld [vmem:[%s2 + $0xc0] sm:$0xff]
    %v109 = vld [vmem:[%s2 + $0xc8] sm:$0xff]
    %v110 = vld [vmem:[%s2 + $0xd0] sm:$0xff]
    %v111 = vld [vmem:[%s2 + $0xd8] sm:$0xff]
    %v112 = vld [vmem:[%s2 + $0xe0] sm:$0xff]
    %v113 = vld [vmem:[%s2 + $0xe8] sm:$0xff]
    %v114 = vld [vmem:[%s2 + $0xf0] sm:$0xff]
    %v115 = vld [vmem:[%s2 + $0xf8] sm:$0xff]
    %v116 = vld [vmem:[%s2 + $0x100] sm:$0xff]
    %v117 = vld [vmem:[%s2 + $0x108] sm:$0xff]
    %v118 = vld [vmem:[%s2 + $0x110] sm:$0xff]
    %v119 = vld [vmem:[%s2 + $0x118] sm:$0xff]
    %v120 = vld [vmem:[%s2 + $0x120] sm:$0xff]
    %v121 = vld [vmem:[%s2 + $0x128] sm:$0xff]
    %v122 = vld [vmem:[%s2 + $0x130] sm:$0xff]
    %v123 = vld [vmem:[%s2 + $0x138] sm:$0xff]
    %v124 = vld [vmem:[%s2 + $0x140] sm:$0xff]
    %v125 = vld [vmem:[%s2 + $0x148] sm:$0xff]
    %v126 = vld [vmem:[%s2 + $0x150] sm:$0xff]
    %v127 = vld [vmem:[%s2 + $0x158] sm:$0xff]
    %v128 = vld [vmem:[%s2 + $0x160] sm:$0xff]
    %v129 = vld [vmem:[%s2 + $0x168] sm:$0xff]
    %v130 = vld [vmem:[%s2 + $0x170] sm:$0xff]
    %v131 = vld [vmem:[%s2 + $0x178] sm:$0xff]
    %v132 = vld [vmem:[%s2 + $0x180] sm:$0xff]
    %v133 = vld [vmem:[%s2 + $0x188] sm:$0xff]
    %v136 = vunpack.c.l.b16 %v32
    %v137 = vunpack.c.h.b16 %v32
    %v138 = vunpack.c.l.b16 %v33
    %v139 = vunpack.c.h.b16 %v33
    %v140 = vpack.c.b16 %v136, %v136
    %v141 = vpack.c.b16 %v137, %v137
    %v142 = vpack.c.b16 %v138, %v138
    %v143 = vpack.c.b16 %v139, %v139
    %v197 = vunpack.c.l.b16 %v84
    %v198 = vunpack.c.h.b16 %v84
    %v199 = vunpack.c.l.b16 %v85
    %v200 = vunpack.c.h.b16 %v85
    %v201 = vunpack.c.l.b16 %v86
    %v202 = vunpack.c.h.b16 %v86
    %v203 = vunpack.c.l.b16 %v87
    %v204 = vunpack.c.h.b16 %v87
    %v205 = vunpack.c.l.b16 %v88
    %v206 = vunpack.c.h.b16 %v88
    %v207 = vunpack.c.l.b16 %v89
    %v208 = vunpack.c.h.b16 %v89
    %v209 = vunpack.c.l.b16 %v90
    %v210 = vunpack.c.h.b16 %v90
    %v211 = vunpack.c.l.b16 %v91
    %v212 = vunpack.c.h.b16 %v91
    %v213 = vunpack.c.l.b16 %v92
    %v214 = vunpack.c.h.b16 %v92
    %v215 = vunpack.c.l.b16 %v93
    %v216 = vunpack.c.h.b16 %v93
    %v217 = vunpack.c.l.b16 %v94
    %v218 = vunpack.c.h.b16 %v94
    %v219 = vunpack.c.l.b16 %v95
    %v220 = vunpack.c.h.b16 %v95
    %v221 = vunpack.c.l.b16 %v96
    %v222 = vunpack.c.h.b16 %v96
    %v223 = vunpack.c.l.b16 %v97
    %v224 = vunpack.c.h.b16 %v97
    %v225 = vunpack.c.l.b16 %v98
    %v226 = vunpack.c.h.b16 %v98
    %v227 = vunpack.c.l.b16 %v99
    %v228 = vunpack.c.h.b16 %v99
    %v229 = vunpack.c.l.b16 %v100
    %v230 = vunpack.c.h.b16 %v100
    %v231 = vunpack.c.l.b16 %v101
    %v232 = vunpack.c.h.b16 %v101
    %v233 = vunpack.c.l.b16 %v102
    %v234 = vunpack.c.h.b16 %v102
    %v235 = vunpack.c.l.b16 %v103
    %v236 = vunpack.c.h.b16 %v103
    %v237 = vunpack.c.l.b16 %v104
    %v238 = vunpack.c.h.b16 %v104
    %v239 = vunpack.c.l.b16 %v105
    %v240 = vunpack.c.h.b16 %v105
    %v241 = vunpack.c.l.b16 %v106
    %v242 = vunpack.c.h.b16 %v106
    %v243 = vunpack.c.l.b16 %v107
    %v244 = vunpack.c.h.b16 %v107
    %v245 = vunpack.c.l.b16 %v108
    %v246 = vunpack.c.h.b16 %v108
    %v247 = vunpack.c.l.b16 %v109
    %v248 = vunpack.c.h.b16 %v109
    %v249 = vunpack.c.l.b16 %v110
    %v250 = vunpack.c.h.b16 %v110
    %v251 = vunpack.c.l.b16 %v111
    %v252 = vunpack.c.h.b16 %v111
    %v253 = vunpack.c.l.b16 %v112
    %v254 = vunpack.c.h.b16 %v112
    %v255 = vunpack.c.l.b16 %v113
    %v256 = vunpack.c.h.b16 %v113
    %v257 = vunpack.c.l.b16 %v114
    %v258 = vunpack.c.h.b16 %v114
    %v259 = vunpack.c.l.b16 %v115
    %v260 = vunpack.c.h.b16 %v115
    %v261 = vunpack.c.l.b16 %v116
    %v262 = vunpack.c.h.b16 %v116
    %v263 = vunpack.c.l.b16 %v117
    %v264 = vunpack.c.h.b16 %v117
    %v265 = vunpack.c.l.b16 %v118
    %v266 = vunpack.c.h.b16 %v118
    %v267 = vunpack.c.l.b16 %v119
    %v268 = vunpack.c.h.b16 %v119
    %v269 = vunpack.c.l.b16 %v120
    %v270 = vunpack.c.h.b16 %v120
    %v271 = vunpack.c.l.b16 %v121
    %v272 = vunpack.c.h.b16 %v121
    %v273 = vunpack.c.l.b16 %v122
    %v274 = vunpack.c.h.b16 %v122
    %v275 = vunpack.c.l.b16 %v123
    %v276 = vunpack.c.h.b16 %v123
    %v277 = vunpack.c.l.b16 %v124
    %v278 = vunpack.c.h.b16 %v124
    %v279 = vunpack.c.l.b16 %v125
    %v280 = vunpack.c.h.b16 %v125
    %v281 = vunpack.c.l.b16 %v126
    %v282 = vunpack.c.h.b16 %v126
    %v283 = vunpack.c.l.b16 %v127
    %v284 = vunpack.c.h.b16 %v127
    %v285 = vunpack.c.l.b16 %v128
    %v286 = vunpack.c.h.b16 %v128
    %v287 = vunpack.c.l.b16 %v129
    %v288 = vunpack.c.h.b16 %v129
    %v289 = vunpack.c.l.b16 %v130
    %v290 = vunpack.c.h.b16 %v130
    %v291 = vunpack.c.l.b16 %v131
    %v292 = vunpack.c.h.b16 %v131
    %v293 = vunpack.c.l.b16 %v132
    %v294 = vunpack.c.h.b16 %v132
    %v295 = vunpack.c.l.b16 %v133
    %v296 = vunpack.c.h.b16 %v133
    %v297 = vpack.c.b16 %v199, %v197
    %v298 = vpack.c.b16 %v200, %v198
    %v299 = vpack.c.b16 %v203, %v201
    %v300 = vpack.c.b16 %v204, %v202
    %v301 = vpack.c.b16 %v207, %v205
    %v302 = vpack.c.b16 %v208, %v206
    %v303 = vpack.c.b16 %v211, %v209
    %v304 = vpack.c.b16 %v212, %v210
    %v305 = vpack.c.b16 %v215, %v213
    %v306 = vpack.c.b16 %v216, %v214
    %v307 = vpack.c.b16 %v219, %v217
    %v308 = vpack.c.b16 %v220, %v218
    %v309 = vpack.c.b16 %v223, %v221
    %v310 = vpack.c.b16 %v224, %v222
    %v311 = vpack.c.b16 %v227, %v225
    %v312 = vpack.c.b16 %v228, %v226
    %v313 = vpack.c.b16 %v231, %v229
    %v314 = vpack.c.b16 %v232, %v230
    %v315 = vpack.c.b16 %v235, %v233
    %v316 = vpack.c.b16 %v236, %v234
    %v317 = vpack.c.b16 %v239, %v237
    %v318 = vpack.c.b16 %v240, %v238
    %v319 = vpack.c.b16 %v243, %v241
    %v320 = vpack.c.b16 %v244, %v242
    %v321 = vpack.c.b16 %v247, %v245
    %v322 = vpack.c.b16 %v248, %v246
    %v323 = vpack.c.b16 %v251, %v249
    %v324 = vpack.c.b16 %v252, %v250
    %v325 = vpack.c.b16 %v255, %v253
    %v326 = vpack.c.b16 %v256, %v254
    %v327 = vpack.c.b16 %v259, %v257
    %v328 = vpack.c.b16 %v260, %v258
    %v329 = vpack.c.b16 %v263, %v261
    %v330 = vpack.c.b16 %v264, %v262
    %v331 = vpack.c.b16 %v267, %v265
    %v332 = vpack.c.b16 %v268, %v266
    %v333 = vpack.c.b16 %v271, %v269
    %v334 = vpack.c.b16 %v272, %v270
    %v335 = vpack.c.b16 %v275, %v273
    %v336 = vpack.c.b16 %v276, %v274
    %v337 = vpack.c.b16 %v279, %v277
    %v338 = vpack.c.b16 %v280, %v278
    %v339 = vpack.c.b16 %v283, %v281
    %v340 = vpack.c.b16 %v284, %v282
    %v341 = vpack.c.b16 %v287, %v285
    %v342 = vpack.c.b16 %v288, %v286
    %v343 = vpack.c.b16 %v291, %v289
    %v344 = vpack.c.b16 %v292, %v290
    %v345 = vpack.c.b16 %v295, %v293
    %v346 = vpack.c.b16 %v296, %v294
    %vm397 = vcmask 130048
    %v399 = vsel %vm397, %v143, 0
    %401 = vmatprep.subr.bf16.mxu0 %v298
    %402 = vmatpush1.bf16.msra.mxu0 %v297
    %403 = vmatprep.subr.bf16.mxu0 %v300
    %404 = vmatpush1.bf16.msra.mxu0 %v299
    %405 = vmatprep.subr.bf16.mxu0 %v302
    %406 = vmatpush1.bf16.msra.mxu0 %v301
    %407 = vmatprep.subr.bf16.mxu0 %v304
    %408 = vmatpush1.bf16.msra.mxu0 %v303
    %409 = vmatprep.subr.bf16.mxu0 %v306
    %410 = vmatpush1.bf16.msra.mxu0 %v305
    %411 = vmatprep.subr.bf16.mxu0 %v308
    %412 = vmatpush1.bf16.msra.mxu0 %v307
    %413 = vmatprep.subr.bf16.mxu0 %v310
    %414 = vmatpush1.bf16.msra.mxu0 %v309
    %415 = vmatprep.subr.bf16.mxu0 %v312
    %416 = vmatpush1.bf16.msra.mxu0 %v311
    %417 = vmatprep.subr.bf16.mxu0 %v314
    %418 = vmatpush1.bf16.msra.mxu0 %v313
    %419 = vmatprep.subr.bf16.mxu0 %v316
    %420 = vmatpush1.bf16.msra.mxu0 %v315
    %421 = vmatprep.subr.bf16.mxu0 %v318
    %422 = vmatpush1.bf16.msra.mxu0 %v317
    %423 = vmatprep.subr.bf16.mxu0 %v320
    %424 = vmatpush1.bf16.msra.mxu0 %v319
    %425 = vmatprep.subr.bf16.mxu0 %v322
    %426 = vmatpush1.bf16.msra.mxu0 %v321
    %427 = vmatprep.subr.bf16.mxu0 %v324
    %428 = vmatpush1.bf16.msra.mxu0 %v323
    %429 = vmatprep.subr.bf16.mxu0 %v326
    %430 = vmatpush1.bf16.msra.mxu0 %v325
    %431 = vmatprep.subr.bf16.mxu0 %v328
    %432 = vmatpush1.bf16.msra.mxu0 %v327
    %433 = vmatprep.mubr.bf16.mxu0 %v141
    %434 = vmatmul.mubr.bf16.gmra.mrb[0].mxu0 %v140
    %v435 = vpop.f32.mrb[0].mxu0
    %v436 = vadd.f32 0.0, %v435
    %v437 = vpop.f32.mrb[0].mxu0
    %v438 = vadd.f32 0.0, %v437
    %v439 = vpop.f32.mrb[0].mxu0
    %v440 = vpop.f32.mrb[0].mxu0
    %441 = vdwg.mxu0
    %442 = vmatprep.subr.bf16.mxu0 %v330
    %443 = vmatpush1.bf16.msra.mxu0 %v329
    %444 = vmatprep.subr.bf16.mxu0 %v332
    %445 = vmatpush1.bf16.msra.mxu0 %v331
    %446 = vmatprep.subr.bf16.mxu0 %v334
    %447 = vmatpush1.bf16.msra.mxu0 %v333
    %448 = vmatprep.subr.bf16.mxu0 %v336
    %449 = vmatpush1.bf16.msra.mxu0 %v335
    %450 = vmatprep.subr.bf16.mxu0 %v338
    %451 = vmatpush1.bf16.msra.mxu0 %v337
    %452 = vmatprep.subr.bf16.mxu0 %v340
    %453 = vmatpush1.bf16.msra.mxu0 %v339
    %454 = vmatprep.subr.bf16.mxu0 %v342
    %455 = vmatpush1.bf16.msra.mxu0 %v341
    %456 = vmatprep.subr.bf16.mxu0 %v344
    %457 = vmatpush1.bf16.msra.mxu0 %v343
    %458 = vmatprep.subr.bf16.mxu0 %v346
    %459 = vmatpush1.bf16.msra.mxu0 %v345
    %460 = vmatprep.subr.bf16.mxu0 0
    %461 = vmatpush1.bf16.msra.mxu0 0
    %462 = vmatprep.subr.bf16.mxu0 0
    %463 = vmatpush1.bf16.msra.mxu0 0
    %464 = vmatprep.subr.bf16.mxu0 0
    %465 = vmatpush1.bf16.msra.mxu0 0
    %466 = vmatprep.subr.bf16.mxu0 0
    %467 = vmatpush1.bf16.msra.mxu0 0
    %468 = vmatprep.subr.bf16.mxu0 0
    %469 = vmatpush1.bf16.msra.mxu0 0
    %470 = vmatprep.subr.bf16.mxu0 0
    %471 = vmatpush1.bf16.msra.mxu0 0
    %472 = vmatprep.subr.bf16.mxu0 0
    %473 = vmatpush1.bf16.msra.mxu0 0
    %474 = vmatprep.mubr.bf16.mxu0 %v399
    %475 = vmatmul.mubr.bf16.gmra.mrb[0].mxu0 %v142
    %v476 = vpop.f32.mrb[0].mxu0
    %v477 = vadd.f32 %v436, %v476
    %v478 = vpop.f32.mrb[0].mxu0
    %v479 = vadd.f32 %v438, %v478
    %v480 = vpop.f32.mrb[0].mxu0
    %v481 = vpop.f32.mrb[0].mxu0
    %482 = vdwg.mxu0
    %v533 = vunpack.c.l.b16 %v34
    %v534 = vunpack.c.h.b16 %v34
    %v535 = vunpack.c.l.b16 %v35
    %v536 = vunpack.c.h.b16 %v35
    %v537 = vunpack.c.l.b16 %v36
    %v538 = vunpack.c.h.b16 %v36
    %v539 = vunpack.c.l.b16 %v37
    %v540 = vunpack.c.h.b16 %v37
    %v541 = vunpack.c.l.b16 %v38
    %v542 = vunpack.c.h.b16 %v38
    %v543 = vunpack.c.l.b16 %v39
    %v544 = vunpack.c.h.b16 %v39
    %v545 = vunpack.c.l.b16 %v40
    %v546 = vunpack.c.h.b16 %v40
    %v547 = vunpack.c.l.b16 %v41
    %v548 = vunpack.c.h.b16 %v41
    %v549 = vunpack.c.l.b16 %v42
    %v550 = vunpack.c.h.b16 %v42
    %v551 = vunpack.c.l.b16 %v43
    %v552 = vunpack.c.h.b16 %v43
    %v553 = vunpack.c.l.b16 %v44
    %v554 = vunpack.c.h.b16 %v44
    %v555 = vunpack.c.l.b16 %v45
    %v556 = vunpack.c.h.b16 %v45
    %v557 = vunpack.c.l.b16 %v46
    %v558 = vunpack.c.h.b16 %v46
    %v559 = vunpack.c.l.b16 %v47
    %v560 = vunpack.c.h.b16 %v47
    %v561 = vunpack.c.l.b16 %v48
    %v562 = vunpack.c.h.b16 %v48
    %v563 = vunpack.c.l.b16 %v49
    %v564 = vunpack.c.h.b16 %v49
    %v565 = vunpack.c.l.b16 %v50
    %v566 = vunpack.c.h.b16 %v50
    %v567 = vunpack.c.l.b16 %v51
    %v568 = vunpack.c.h.b16 %v51
    %v569 = vunpack.c.l.b16 %v52
    %v570 = vunpack.c.h.b16 %v52
    %v571 = vunpack.c.l.b16 %v53
    %v572 = vunpack.c.h.b16 %v53
    %v573 = vunpack.c.l.b16 %v54
    %v574 = vunpack.c.h.b16 %v54
    %v575 = vunpack.c.l.b16 %v55
    %v576 = vunpack.c.h.b16 %v55
    %v577 = vunpack.c.l.b16 %v56
    %v578 = vunpack.c.h.b16 %v56
    %v579 = vunpack.c.l.b16 %v57
    %v580 = vunpack.c.h.b16 %v57
    %v581 = vunpack.c.l.b16 %v58
    %v582 = vunpack.c.h.b16 %v58
    %v583 = vunpack.c.l.b16 %v59
    %v584 = vunpack.c.h.b16 %v59
    %v585 = vunpack.c.l.b16 %v60
    %v586 = vunpack.c.h.b16 %v60
    %v587 = vunpack.c.l.b16 %v61
    %v588 = vunpack.c.h.b16 %v61
    %v589 = vunpack.c.l.b16 %v62
    %v590 = vunpack.c.h.b16 %v62
    %v591 = vunpack.c.l.b16 %v63
    %v592 = vunpack.c.h.b16 %v63
    %v593 = vunpack.c.l.b16 %v64
    %v594 = vunpack.c.h.b16 %v64
    %v595 = vunpack.c.l.b16 %v65
    %v596 = vunpack.c.h.b16 %v65
    %v597 = vunpack.c.l.b16 %v66
    %v598 = vunpack.c.h.b16 %v66
    %v599 = vunpack.c.l.b16 %v67
    %v600 = vunpack.c.h.b16 %v67
    %v601 = vunpack.c.l.b16 %v68
    %v602 = vunpack.c.h.b16 %v68
    %v603 = vunpack.c.l.b16 %v69
    %v604 = vunpack.c.h.b16 %v69
    %v605 = vunpack.c.l.b16 %v70
    %v606 = vunpack.c.h.b16 %v70
    %v607 = vunpack.c.l.b16 %v71
    %v608 = vunpack.c.h.b16 %v71
    %v609 = vunpack.c.l.b16 %v72
    %v610 = vunpack.c.h.b16 %v72
    %v611 = vunpack.c.l.b16 %v73
    %v612 = vunpack.c.h.b16 %v73
    %v613 = vunpack.c.l.b16 %v74
    %v614 = vunpack.c.h.b16 %v74
    %v615 = vunpack.c.l.b16 %v75
    %v616 = vunpack.c.h.b16 %v75
    %v617 = vunpack.c.l.b16 %v76
    %v618 = vunpack.c.h.b16 %v76
    %v619 = vunpack.c.l.b16 %v77
    %v620 = vunpack.c.h.b16 %v77
    %v621 = vunpack.c.l.b16 %v78
    %v622 = vunpack.c.h.b16 %v78
    %v623 = vunpack.c.l.b16 %v79
    %v624 = vunpack.c.h.b16 %v79
    %v625 = vunpack.c.l.b16 %v80
    %v626 = vunpack.c.h.b16 %v80
    %v627 = vunpack.c.l.b16 %v81
    %v628 = vunpack.c.h.b16 %v81
    %v629 = vunpack.c.l.b16 %v82
    %v630 = vunpack.c.h.b16 %v82
    %v631 = vunpack.c.l.b16 %v83
    %v632 = vunpack.c.h.b16 %v83
    %v633 = vpack.c.b16 %v535, %v533
    %v634 = vpack.c.b16 %v536, %v534
    %v635 = vpack.c.b16 %v539, %v537
    %v636 = vpack.c.b16 %v540, %v538
    %v637 = vpack.c.b16 %v543, %v541
    %v638 = vpack.c.b16 %v544, %v542
    %v639 = vpack.c.b16 %v547, %v545
    %v640 = vpack.c.b16 %v548, %v546
    %v641 = vpack.c.b16 %v551, %v549
    %v642 = vpack.c.b16 %v552, %v550
    %v643 = vpack.c.b16 %v555, %v553
    %v644 = vpack.c.b16 %v556, %v554
    %v645 = vpack.c.b16 %v559, %v557
    %v646 = vpack.c.b16 %v560, %v558
    %v647 = vpack.c.b16 %v563, %v561
    %v648 = vpack.c.b16 %v564, %v562
    %v649 = vpack.c.b16 %v567, %v565
    %v650 = vpack.c.b16 %v568, %v566
    %v651 = vpack.c.b16 %v571, %v569
    %v652 = vpack.c.b16 %v572, %v570
    %v653 = vpack.c.b16 %v575, %v573
    %v654 = vpack.c.b16 %v576, %v574
    %v655 = vpack.c.b16 %v579, %v577
    %v656 = vpack.c.b16 %v580, %v578
    %v657 = vpack.c.b16 %v583, %v581
    %v658 = vpack.c.b16 %v584, %v582
    %v659 = vpack.c.b16 %v587, %v585
    %v660 = vpack.c.b16 %v588, %v586
    %v661 = vpack.c.b16 %v591, %v589
    %v662 = vpack.c.b16 %v592, %v590
    %v663 = vpack.c.b16 %v595, %v593
    %v664 = vpack.c.b16 %v596, %v594
    %v665 = vpack.c.b16 %v599, %v597
    %v666 = vpack.c.b16 %v600, %v598
    %v667 = vpack.c.b16 %v603, %v601
    %v668 = vpack.c.b16 %v604, %v602
    %v669 = vpack.c.b16 %v607, %v605
    %v670 = vpack.c.b16 %v608, %v606
    %v671 = vpack.c.b16 %v611, %v609
    %v672 = vpack.c.b16 %v612, %v610
    %v673 = vpack.c.b16 %v615, %v613
    %v674 = vpack.c.b16 %v616, %v614
    %v675 = vpack.c.b16 %v619, %v617
    %v676 = vpack.c.b16 %v620, %v618
    %v677 = vpack.c.b16 %v623, %v621
    %v678 = vpack.c.b16 %v624, %v622
    %v679 = vpack.c.b16 %v627, %v625
    %v680 = vpack.c.b16 %v628, %v626
    %v681 = vpack.c.b16 %v631, %v629
    %v682 = vpack.c.b16 %v632, %v630
    %733 = vmatprep.subr.bf16.mxu0 %v634
    %734 = vmatpush1.bf16.msra.mxu0 %v633
    %735 = vmatprep.subr.bf16.mxu0 %v636
    %736 = vmatpush1.bf16.msra.mxu0 %v635
    %737 = vmatprep.subr.bf16.mxu0 %v638
    %738 = vmatpush1.bf16.msra.mxu0 %v637
    %739 = vmatprep.subr.bf16.mxu0 %v640
    %740 = vmatpush1.bf16.msra.mxu0 %v639
    %741 = vmatprep.subr.bf16.mxu0 %v642
    %742 = vmatpush1.bf16.msra.mxu0 %v641
    %743 = vmatprep.subr.bf16.mxu0 %v644
    %744 = vmatpush1.bf16.msra.mxu0 %v643
    %745 = vmatprep.subr.bf16.mxu0 %v646
    %746 = vmatpush1.bf16.msra.mxu0 %v645
    %747 = vmatprep.subr.bf16.mxu0 %v648
    %748 = vmatpush1.bf16.msra.mxu0 %v647
    %749 = vmatprep.subr.bf16.mxu0 %v650
    %750 = vmatpush1.bf16.msra.mxu0 %v649
    %751 = vmatprep.subr.bf16.mxu0 %v652
    %752 = vmatpush1.bf16.msra.mxu0 %v651
    %753 = vmatprep.subr.bf16.mxu0 %v654
    %754 = vmatpush1.bf16.msra.mxu0 %v653
    %755 = vmatprep.subr.bf16.mxu0 %v656
    %756 = vmatpush1.bf16.msra.mxu0 %v655
    %757 = vmatprep.subr.bf16.mxu0 %v658
    %758 = vmatpush1.bf16.msra.mxu0 %v657
    %759 = vmatprep.subr.bf16.mxu0 %v660
    %760 = vmatpush1.bf16.msra.mxu0 %v659
    %761 = vmatprep.subr.bf16.mxu0 %v662
    %762 = vmatpush1.bf16.msra.mxu0 %v661
    %763 = vmatprep.subr.bf16.mxu0 %v664
    %764 = vmatpush1.bf16.msra.mxu0 %v663
    %765 = vmatprep.mubr.bf16.mxu0 %v141
    %766 = vmatmul.mubr.bf16.gmra.mrb[0].mxu0 %v140
    %v767 = vpop.f32.mrb[0].mxu0
    %v768 = vadd.f32 %v477, %v767
    %v769 = vpop.f32.mrb[0].mxu0
    %v770 = vadd.f32 %v479, %v769
    %v771 = vpop.f32.mrb[0].mxu0
    %v772 = vpop.f32.mrb[0].mxu0
    %773 = vdwg.mxu0
    %774 = vmatprep.subr.bf16.mxu0 %v666
    %775 = vmatpush1.bf16.msra.mxu0 %v665
    %776 = vmatprep.subr.bf16.mxu0 %v668
    %777 = vmatpush1.bf16.msra.mxu0 %v667
    %778 = vmatprep.subr.bf16.mxu0 %v670
    %779 = vmatpush1.bf16.msra.mxu0 %v669
    %780 = vmatprep.subr.bf16.mxu0 %v672
    %781 = vmatpush1.bf16.msra.mxu0 %v671
    %782 = vmatprep.subr.bf16.mxu0 %v674
    %783 = vmatpush1.bf16.msra.mxu0 %v673
    %784 = vmatprep.subr.bf16.mxu0 %v676
    %785 = vmatpush1.bf16.msra.mxu0 %v675
    %786 = vmatprep.subr.bf16.mxu0 %v678
    %787 = vmatpush1.bf16.msra.mxu0 %v677
    %788 = vmatprep.subr.bf16.mxu0 %v680
    %789 = vmatpush1.bf16.msra.mxu0 %v679
    %790 = vmatprep.subr.bf16.mxu0 %v682
    %791 = vmatpush1.bf16.msra.mxu0 %v681
    %792 = vmatprep.subr.bf16.mxu0 0
    %793 = vmatpush1.bf16.msra.mxu0 0
    %794 = vmatprep.subr.bf16.mxu0 0
    %795 = vmatpush1.bf16.msra.mxu0 0
    %796 = vmatprep.subr.bf16.mxu0 0
    %797 = vmatpush1.bf16.msra.mxu0 0
    %798 = vmatprep.subr.bf16.mxu0 0
    %799 = vmatpush1.bf16.msra.mxu0 0
    %800 = vmatprep.subr.bf16.mxu0 0
    %801 = vmatpush1.bf16.msra.mxu0 0
    %802 = vmatprep.subr.bf16.mxu0 0
    %803 = vmatpush1.bf16.msra.mxu0 0
    %804 = vmatprep.subr.bf16.mxu0 0
    %805 = vmatpush1.bf16.msra.mxu0 0
    %806 = vmatprep.mubr.bf16.mxu0 %v399
    %807 = vmatmul.mubr.bf16.gmra.mrb[0].mxu0 %v142
    %v808 = vpop.f32.mrb[0].mxu0
    %v809 = vadd.f32 %v768, %v808
    %v810 = vpop.f32.mrb[0].mxu0
    %v811 = vadd.f32 %v770, %v810
    %v812 = vpop.f32.mrb[0].mxu0
    %v813 = vpop.f32.mrb[0].mxu0
    %814 = vdwg.mxu0
    %v815 = vlaneseq
    %v816 = vshrl.u32 %v815, 7
    %vm817 = vcmp.lt.s32.totalorder %v816, 0
    %v818 = vsub.s32 0, %v816
    %v819 = vsel %vm817, %v818, %v816
    %v820 = vmul.u32.u64.compose %v819, 2863311531
    %v821 = vextract.low.u32 %v820
    %v822 = vextract.high.u32 %v820
    %v823 = vshrl.u32 %v822, 1
    %v824 = vmul.u32 %v823, 3
    %v825 = vsub.s32 %v819, %v824
    %v826 = vsub.s32 0, %v825
    %v827 = vsel %vm817, %v826, %v825
    %vm828 = vcmp.ne.s32.totalorder %v827, 0
    %vm829 = vcmp.lt.s32.totalorder %v827, 0
    %vm830 = vmand %vm829, %vm828
    %v831 = vadd.s32 %v827, 3
    %v832 = vsel %vm830, %v831, %v827
    %vm833 = vcmp.eq.s32.totalorder %v832, 0
    %s834 = sld [smem:[#allocation2]]
    %v835 = vstv %s834
    %v836 = vsel %vm833, %v835, 0.0
    %s837 = sld [smem:[#allocation2 + $0x1]]
    %v838 = vstv %s837
    %v839 = vsel %vm833, %v838, 0.0
    %vm840 = vcmp.eq.s32.totalorder %v832, 1
    %s841 = sld [smem:[#allocation2 + $0x80]]
    %v842 = vstv %s841
    %v843 = vsel %vm840, %v842, %v836
    %s844 = sld [smem:[#allocation2 + $0x81]]
    %v845 = vstv %s844
    %v846 = vsel %vm840, %v845, %v839
    %vm847 = vcmp.eq.s32.totalorder %v832, 2
    %s848 = sld [smem:[#allocation2 + $0x100]]
    %v849 = vstv %s848
    %v850 = vsel %vm847, %v849, %v843
    %s851 = sld [smem:[#allocation2 + $0x101]]
    %v852 = vstv %s851
    %v853 = vsel %vm847, %v852, %v846
    %v854 = vmul.f32 %v809, %v850
    %v855 = vmul.f32 %v811, %v850
    %v856 = vadd.f32 %v854, %v853
    %v857 = vadd.f32 %v855, %v853
    %858 = vst [vmem:[%s4] sm:$0x3f] %v856
    %859 = vst [vmem:[%s4 + $0x8] sm:$0x3f] %v857
    // Predicated region
    $region22: #{data_preprocess.1} parent=1 // pred_check
      _
    $region23: #{data_preprocess.1} parent=1 // pred_check_branch
      %861 = sbr.rel (0) target = $region25
    $region24: #{data_preprocess.1} parent=1 // pred_region
      _
    $region25: #{data_preprocess.1} parent=1 // pred_fallthru
      _
    // Predicated region
    $region26: #{data_preprocess.1} parent=1 // pred_check
      _
    $region27: #{data_preprocess.1} parent=1 // pred_check_branch
      %863 = sbr.rel (0) target = $region29
    $region28: #{data_preprocess.1} parent=1 // pred_region
      _
    $region29: #{data_preprocess.1} parent=1 // pred_fallthru
      _
    %864 = vsyncpa [#allocation3], 1

</llo_original>
